<compile_context>
chip_gen: v7x
topology: tpu7x:2x2x1
jax: 0.10.0
libtpu: 0.0.40
codegen_flags: <defaults>
</compile_context>

<pallas_src>
import math

import jax
import jax.numpy as jnp
from jax.experimental import pallas as pl
from jax.experimental.pallas import tpu as pltpu

HIDDEN = 128    # config.hidden_size
MLP_DIM = 512   # config.transformer['mlp_dim'] (4 * hidden)

_GELU_C = math.sqrt(2.0 / math.pi)


def _gelu_tanh(x):
    # tanh-approximate GELU, all VPU/EUP ops (f32).
    return 0.5 * x * (1.0 + jnp.tanh(_GELU_C * (x + 0.044715 * (x * x * x))))


def mlp_kernel(x_ref, w1_ref, b1_ref, w2_ref, b2_ref, o_ref):
    # x_ref : (tb, HIDDEN)  bf16      (streamed per grid step)
    # w1_ref: (HIDDEN, MLP_DIM) bf16  (resident)
    # b1_ref: (1, MLP_DIM)  f32
    # w2_ref: (MLP_DIM, HIDDEN) bf16  (resident)
    # b2_ref: (1, HIDDEN)   f32
    # o_ref : (tb, HIDDEN)  f32
    b1 = b1_ref[...]                       # read once; implicit (1,N) broadcast
    b2 = b2_ref[...]
    h = jnp.dot(x_ref[...], w1_ref[...],
                preferred_element_type=jnp.float32) + b1
    h = _gelu_tanh(h)
    # Dropout(p) in eval mode == identity.
    y = jnp.dot(h.astype(jnp.bfloat16), w2_ref[...],
                preferred_element_type=jnp.float32) + b2
    # Dropout(p) in eval mode == identity.
    o_ref[...] = y.astype(o_ref.dtype)


def mlp_forward(x, w1, b1, w2, b2, *, tb=512):
    """x: (..., HIDDEN) f32. Weights stored (in_features, out_features)."""
    orig_shape = x.shape
    assert orig_shape[-1] == HIDDEN, "last dim must be hidden_size"
    x2 = x.reshape(-1, HIDDEN)
    M = x2.shape[0]

    # bf16 inputs halve HBM traffic; MXU accumulates in f32.
    x_bf = x2.astype(jnp.bfloat16)
    w1_bf = w1.astype(jnp.bfloat16)
    w2_bf = w2.astype(jnp.bfloat16)
    b1_f = b1.astype(jnp.float32).reshape(1, MLP_DIM)
    b2_f = b2.astype(jnp.float32).reshape(1, HIDDEN)

    # Single block for small problems; large tiles (512+) for big batches.
    tb_eff = min(tb, M)
    assert M % tb_eff == 0, "row count must be divisible by the batch tile"
    assert tb_eff == M or tb_eff % 16 == 0, "bf16 tile needs sublane multiple of 16"
    grid = (M // tb_eff,)

    out = pl.pallas_call(
        mlp_kernel,
        out_shape=jax.ShapeDtypeStruct((M, HIDDEN), jnp.float32),
        grid_spec=pl.GridSpec(
            grid=grid,
            in_specs=[
                pl.BlockSpec((tb_eff, HIDDEN), lambda i: (i, 0)),    # x tile
                pl.BlockSpec((HIDDEN, MLP_DIM), lambda i: (0, 0)),   # w1 (resident)
                pl.BlockSpec((1, MLP_DIM), lambda i: (0, 0)),        # b1
                pl.BlockSpec((MLP_DIM, HIDDEN), lambda i: (0, 0)),   # w2 (resident)
                pl.BlockSpec((1, HIDDEN), lambda i: (0, 0)),         # b2
            ],
            out_specs=pl.BlockSpec((tb_eff, HIDDEN), lambda i: (i, 0)),
        ),
        compiler_params=pltpu.CompilerParams(
            dimension_semantics=("parallel",),   # megacore-shard batch tiles
        ),
    )(x_bf, w1_bf, b1_f, w2_bf, b2_f)
    return out.reshape(orig_shape[:-1] + (HIDDEN,))


def init_params(key):
    """Match Mlp._init_weights: xavier_uniform weights, normal(std=1e-6) biases."""
    k1, k2, k3, k4 = jax.random.split(key, 4)
    bound1 = math.sqrt(6.0 / (HIDDEN + MLP_DIM))
    bound2 = math.sqrt(6.0 / (MLP_DIM + HIDDEN))
    w1 = jax.random.uniform(k1, (HIDDEN, MLP_DIM), jnp.float32, -bound1, bound1)
    w2 = jax.random.uniform(k2, (MLP_DIM, HIDDEN), jnp.float32, -bound2, bound2)
    b1 = 1e-6 * jax.random.normal(k3, (MLP_DIM,), jnp.float32)
    b2 = 1e-6 * jax.random.normal(k4, (HIDDEN,), jnp.float32)
    return w1, b1, w2, b2


def ref_forward(x, w1, b1, w2, b2):
    """Pure-JAX reference mirroring the kernel's bf16-input / f32-accumulate math."""
    xb = x.reshape(-1, HIDDEN).astype(jnp.bfloat16).astype(jnp.float32)
    w1b = w1.astype(jnp.bfloat16).astype(jnp.float32)
    w2b = w2.astype(jnp.bfloat16).astype(jnp.float32)
    h = jnp.dot(xb, w1b, precision=jax.lax.Precision.HIGHEST) + b1.reshape(1, -1)
    h = _gelu_tanh(h)
    hb = h.astype(jnp.bfloat16).astype(jnp.float32)
    y = jnp.dot(hb, w2b, precision=jax.lax.Precision.HIGHEST) + b2.reshape(1, -1)
    return y.reshape(x.shape[:-1] + (HIDDEN,))


if __name__ == "__main__":
    key = jax.random.PRNGKey(0)
    kx, kp = jax.random.split(key)

    B, S = 2, 8  # small batch of ViT tokens: (batch, seq, hidden)
    x = jax.random.normal(kx, (B, S, HIDDEN), jnp.float32)
    w1, b1, w2, b2 = init_params(kp)

    out = mlp_forward(x, w1, b1, w2, b2)
    out = jax.block_until_ready(out)

    ref = ref_forward(x, w1, b1, w2, b2)
    assert out.shape == (B, S, HIDDEN)
    assert jnp.allclose(out, ref, atol=5e-3, rtol=5e-3), float(
        jnp.max(jnp.abs(out - ref)))

    print("KERNEL_OK")
</pallas_src>

<mosaic_0001>
module attributes {stable_mosaic.version = 11 : i64} {
  func.func @mlp_kernel(%arg0: i32, %arg1: memref<16x128xbf16, #tpu.memory_space<vmem>>, %arg2: memref<128x512xbf16, #tpu.memory_space<vmem>>, %arg3: memref<1x512xf32, #tpu.memory_space<vmem>>, %arg4: memref<512x128xbf16, #tpu.memory_space<vmem>>, %arg5: memref<1x128xf32, #tpu.memory_space<vmem>>, %arg6: memref<16x128xf32, #tpu.memory_space<vmem>>) attributes {dimension_semantics = [#tpu.dimension_semantics<parallel>], iteration_bounds = array<i64: 1>, scalar_prefetch = 0 : i64, scratch_operands = 0 : i64, tpu.core_type = #tpu.core_type<tc>, window_params = [{transform_indices = @transform_0, window_bounds = array<i64: 16, 128>}, {pipeline_mode = #tpu.pipeline_mode<synchronous>, transform_indices = @transform_1, window_bounds = array<i64: 128, 512>}, {pipeline_mode = #tpu.pipeline_mode<synchronous>, transform_indices = @transform_2, window_bounds = array<i64: 1, 512>}, {pipeline_mode = #tpu.pipeline_mode<synchronous>, transform_indices = @transform_3, window_bounds = array<i64: 512, 128>}, {pipeline_mode = #tpu.pipeline_mode<synchronous>, transform_indices = @transform_4, window_bounds = array<i64: 1, 128>}, {transform_indices = @transform_5, window_bounds = array<i64: 16, 128>}]} {
    %c0 = arith.constant 0 : index
    %c0_0 = arith.constant 0 : index
    %0 = vector.load %arg3[%c0, %c0_0] : memref<1x512xf32, #tpu.memory_space<vmem>>, vector<1x512xf32>
    %c0_1 = arith.constant 0 : index
    %c0_2 = arith.constant 0 : index
    %1 = vector.load %arg5[%c0_1, %c0_2] : memref<1x128xf32, #tpu.memory_space<vmem>>, vector<1x128xf32>
    %c0_3 = arith.constant 0 : index
    %c0_4 = arith.constant 0 : index
    %2 = vector.load %arg1[%c0_3, %c0_4] : memref<16x128xbf16, #tpu.memory_space<vmem>>, vector<16x128xbf16>
    %c0_5 = arith.constant 0 : index
    %c0_6 = arith.constant 0 : index
    %3 = vector.load %arg2[%c0_5, %c0_6] : memref<128x512xbf16, #tpu.memory_space<vmem>>, vector<128x512xbf16>
    %cst = arith.constant dense<0.000000e+00> : vector<16x512xf32>
    %4 = tpu.matmul %2, %3, %cst {dimension_numbers = #tpu.dot_dimension_numbers<[1], [0], [0], [1], [0, 0, 1, 1], [], []>} : vector<16x128xbf16>, vector<128x512xbf16>, vector<16x512xf32> -> vector<16x512xf32>
    %5 = vector.broadcast %0 : vector<1x512xf32> to vector<16x512xf32>
    %6 = arith.addf %4, %5 : vector<16x512xf32>
    %cst_7 = arith.constant 5.000000e-01 : f32
    %7 = vector.broadcast %cst_7 : f32 to vector<16x512xf32>
    %8 = arith.mulf %7, %6 : vector<16x512xf32>
    %9 = arith.mulf %6, %6 : vector<16x512xf32>
    %10 = arith.mulf %9, %6 : vector<16x512xf32>
    %cst_8 = arith.constant 4.471500e-02 : f32
    %11 = vector.broadcast %cst_8 : f32 to vector<16x512xf32>
    %12 = arith.mulf %11, %10 : vector<16x512xf32>
    %13 = arith.addf %6, %12 : vector<16x512xf32>
    %cst_9 = arith.constant 0.797884583 : f32
    %14 = vector.broadcast %cst_9 : f32 to vector<16x512xf32>
    %15 = arith.mulf %14, %13 : vector<16x512xf32>
    %16 = math.tanh %15 : vector<16x512xf32>
    %cst_10 = arith.constant 1.000000e+00 : f32
    %17 = vector.broadcast %cst_10 : f32 to vector<16x512xf32>
    %18 = arith.addf %17, %16 : vector<16x512xf32>
    %19 = arith.mulf %8, %18 : vector<16x512xf32>
    %20 = arith.truncf %19 : vector<16x512xf32> to vector<16x512xbf16>
    %c0_11 = arith.constant 0 : index
    %c0_12 = arith.constant 0 : index
    %21 = vector.load %arg4[%c0_11, %c0_12] : memref<512x128xbf16, #tpu.memory_space<vmem>>, vector<512x128xbf16>
    %cst_13 = arith.constant dense<0.000000e+00> : vector<16x128xf32>
    %22 = tpu.matmul %20, %21, %cst_13 {dimension_numbers = #tpu.dot_dimension_numbers<[1], [0], [0], [1], [0, 0, 1, 1], [], []>} : vector<16x512xbf16>, vector<512x128xbf16>, vector<16x128xf32> -> vector<16x128xf32>
    %23 = vector.broadcast %1 : vector<1x128xf32> to vector<16x128xf32>
    %24 = arith.addf %22, %23 : vector<16x128xf32>
    %c0_14 = arith.constant 0 : index
    %c0_15 = arith.constant 0 : index
    %25 = vector.load %arg6[%c0_14, %c0_15] : memref<16x128xf32, #tpu.memory_space<vmem>>, vector<16x128xf32>
    tpu.vector_store %arg6[%c0_14, %c0_15], %24 {strides = array<i32>} : memref<16x128xf32, #tpu.memory_space<vmem>>, vector<16x128xf32>,
    return
  }
  func.func @transform_0(%arg0: i32) -> (i32, i32) {
    %c0_i32 = arith.constant 0 : i32
    %c0_i32_0 = arith.constant 0 : i32
    return %arg0, %c0_i32 : i32, i32
  }
  func.func @transform_1(%arg0: i32) -> (i32, i32) {
    %c0_i32 = arith.constant 0 : i32
    %c0_i32_0 = arith.constant 0 : i32
    %c0_i32_1 = arith.constant 0 : i32
    return %c0_i32, %c0_i32_0 : i32, i32
  }
  func.func @transform_2(%arg0: i32) -> (i32, i32) {
    %c0_i32 = arith.constant 0 : i32
    %c0_i32_0 = arith.constant 0 : i32
    %c0_i32_1 = arith.constant 0 : i32
    return %c0_i32, %c0_i32_0 : i32, i32
  }
  func.func @transform_3(%arg0: i32) -> (i32, i32) {
    %c0_i32 = arith.constant 0 : i32
    %c0_i32_0 = arith.constant 0 : i32
    %c0_i32_1 = arith.constant 0 : i32
    return %c0_i32, %c0_i32_0 : i32, i32
  }
  func.func @transform_4(%arg0: i32) -> (i32, i32) {
    %c0_i32 = arith.constant 0 : i32
    %c0_i32_0 = arith.constant 0 : i32
    %c0_i32_1 = arith.constant 0 : i32
    return %c0_i32, %c0_i32_0 : i32, i32
  }
  func.func @transform_5(%arg0: i32) -> (i32, i32) {
    %c0_i32 = arith.constant 0 : i32
    %c0_i32_0 = arith.constant 0 : i32
    return %arg0, %c0_i32 : i32, i32
  }
}

</mosaic_0001>

<llo_original>
// kernel: tpu_custom_call.1
$region0: #{tpu_custom_call.1}
  #allocation0 [shape = 'u32[]', space=smem, size = 0x4, offset = 0x4, fixed_abs, tag = 'smem constant byte address 0x4 - core index']
  #allocation1 [shape = 'u32[144,128]{1,0:T(1,128)}', space=vmem, size = 0x12000, scoped, tag = 'internal scratch']
  %s0 = inlined_call_operand.hbm [shape: bf16[16,128], index: 0, kind: input, shape index: {}]
  %s1 = inlined_call_operand.hbm [shape: bf16[128,512], index: 1, kind: input, shape index: {}]
  %s2 = inlined_call_operand.vmem [shape: f32[1,512], index: 2, kind: input, shape index: {}]
  %s3 = inlined_call_operand.hbm [shape: bf16[512,128], index: 3, kind: input, shape index: {}]
  %s4 = inlined_call_operand.vmem [shape: f32[1,128], index: 4, kind: input, shape index: {}]
  %s5 = inlined_call_operand.hbm [shape: f32[16,128], index: 5, kind: output, shape index: {}]
  %s6 = sld [smem:[#allocation0]]
  $region42: #{tpu_custom_call.1} parent=0
    _
  %s8 = ssub.s32 1, %s6
  %s9 = scalar_select 0, %s8, %s6
  $region1: #{tpu_custom_call.1} parent=0
    #allocation2 [shape = 'u8[4096]{0}', space=vmem, size = 0x1000, scoped, tag = 'input window, operand 0, single buffered']
    #allocation3 [shape = 's32[1]{0}', space=sflag, size = 0x4, scoped, tag = 'scoped memory for tpu_custom_call.1']
    #allocation4 [shape = 's32[1]{0}', space=sflag, size = 0x4, scoped, tag = 'scoped memory for tpu_custom_call.1']
    #allocation5 [shape = 'u8[131072]{0}', space=vmem, size = 0x20000, scoped, tag = 'input window, operand 1, single buffered']
    #allocation6 [shape = 's32[1]{0}', space=sflag, size = 0x4, scoped, tag = 'scoped memory for tpu_custom_call.1']
    #allocation7 [shape = 'u8[131072]{0}', space=vmem, size = 0x20000, scoped, tag = 'input window, operand 3, single buffered']
    #allocation8 [shape = 'u8[8192]{0}', space=vmem, size = 0x2000, scoped, tag = 'output window, operand 0, single buffered']
    %10 = vsyncpa [#allocation3], 0
    %11 = vsyncpa [#allocation6], 0
    %12 = vsyncpa [#allocation4], 0
    // Predicated region
    $region2: #{tpu_custom_call.1} parent=1 // pred_check
      _
    $region3: #{tpu_custom_call.1} parent=1 // pred_check_branch
      %14 = sbr.rel (0) target = $region5
    $region4: #{tpu_custom_call.1} parent=1 // pred_region
      %s16 = ssub.s32 128, 128
      %17 = vsyncadd [#allocation3], %s16
      %s18 = sshll.u32 [#allocation2], 4
      %s19 = int_to_ptr.vmem [resolvable:$true] %s18
      %24 = dma.hbm_to_vmem [thread:$0]  %s0, 128, %s19, [#allocation3], 64, 64, 4
    $region5: #{tpu_custom_call.1} parent=1 // pred_fallthru
      _
    // Predicated region
    $region6: #{tpu_custom_call.1} parent=1 // pred_check
      _
    $region7: #{tpu_custom_call.1} parent=1 // pred_check_branch
      %26 = sbr.rel (0) target = $region9
    $region8: #{tpu_custom_call.1} parent=1 // pred_region
      %s28 = ssub.s32 4096, 4096
      %29 = vsyncadd [#allocation6], %s28
      %s30 = sshll.u32 [#allocation5], 4
      %s31 = int_to_ptr.vmem [resolvable:$true] %s30
      %36 = dma.hbm_to_vmem [thread:$0]  %s1, 4096, %s31, [#allocation6], 256, 256, 16
    $region9: #{tpu_custom_call.1} parent=1 // pred_fallthru
      _
    // Predicated region
    $region10: #{tpu_custom_call.1} parent=1 // pred_check
      _
    $region11: #{tpu_custom_call.1} parent=1 // pred_check_branch
      %38 = sbr.rel (0) target = $region13
    $region12: #{tpu_custom_call.1} parent=1 // pred_region
      _
    $region13: #{tpu_custom_call.1} parent=1 // pred_fallthru
      _
    // Predicated region
    $region14: #{tpu_custom_call.1} parent=1 // pred_check
      _
    $region15: #{tpu_custom_call.1} parent=1 // pred_check_branch
      %40 = sbr.rel (0) target = $region17
    $region16: #{tpu_custom_call.1} parent=1 // pred_region
      %s42 = ssub.s32 4096, 4096
      %43 = vsyncadd [#allocation6], %s42
      %s44 = sshll.u32 [#allocation7], 4
      %s45 = int_to_ptr.vmem [resolvable:$true] %s44
      %50 = dma.hbm_to_vmem [thread:$0]  %s3, 4096, %s45, [#allocation6], 64, 64, 4
    $region17: #{tpu_custom_call.1} parent=1 // pred_fallthru
      _
    // Predicated region
    $region18: #{tpu_custom_call.1} parent=1 // pred_check
      _
    $region19: #{tpu_custom_call.1} parent=1 // pred_check_branch
      %52 = sbr.rel (0) target = $region21
    $region20: #{tpu_custom_call.1} parent=1 // pred_region
      _
    $region21: #{tpu_custom_call.1} parent=1 // pred_fallthru
      _
    // Predicated region
    $region22: #{tpu_custom_call.1} parent=1 // pred_check
      _
    $region23: #{tpu_custom_call.1} parent=1 // pred_check_branch
      %54 = sbr.rel (0) target = $region25
    $region24: #{tpu_custom_call.1} parent=1 // pred_region
      %55 = dma.done [#allocation3], 128
    $region25: #{tpu_custom_call.1} parent=1 // pred_fallthru
      _
    // Predicated region
    $region26: #{tpu_custom_call.1} parent=1 // pred_check
      _
    $region27: #{tpu_custom_call.1} parent=1 // pred_check_branch
      %57 = sbr.rel (0) target = $region29
    $region28: #{tpu_custom_call.1} parent=1 // pred_region
      %58 = dma.done [#allocation6], 4096
    $region29: #{tpu_custom_call.1} parent=1 // pred_fallthru
      _
    // Predicated region
    $region30: #{tpu_custom_call.1} parent=1 // pred_check
      _
    $region31: #{tpu_custom_call.1} parent=1 // pred_check_branch
      %60 = sbr.rel (0) target = $region33
    $region32: #{tpu_custom_call.1} parent=1 // pred_region
      %61 = dma.done [#allocation6], 4096
    $region33: #{tpu_custom_call.1} parent=1 // pred_fallthru
      _
    %v63 = vld [vmem:[%s2] sm:$0xf]
    %v64 = vld [vmem:[%s4] sm:$0x1]
    %v65 = vld [vmem:[#allocation2] sm:$0xf]
    %v66 = vld [vmem:[#allocation2 + $0x4] sm:$0xf]
    %v67 = vld [vmem:[#allocation5] sm:$0xff]
    %v68 = vld [vmem:[#allocation5 + $0x8] sm:$0xff]
    %v69 = vld [vmem:[#allocation5 + $0x10] sm:$0xff]
    %v70 = vld [vmem:[#allocation5 + $0x18] sm:$0xff]
    %v71 = vld [vmem:[#allocation5 + $0x20] sm:$0xff]
    %v72 = vld [vmem:[#allocation5 + $0x28] sm:$0xff]
    %v73 = vld [vmem:[#allocation5 + $0x30] sm:$0xff]
    %v74 = vld [vmem:[#allocation5 + $0x38] sm:$0xff]
    %v75 = vld [vmem:[#allocation5 + $0x40] sm:$0xff]
    %v76 = vld [vmem:[#allocation5 + $0x48] sm:$0xff]
    %v77 = vld [vmem:[#allocation5 + $0x50] sm:$0xff]
    %v78 = vld [vmem:[#allocation5 + $0x58] sm:$0xff]
    %v79 = vld [vmem:[#allocation5 + $0x60] sm:$0xff]
    %v80 = vld [vmem:[#allocation5 + $0x68] sm:$0xff]
    %v81 = vld [vmem:[#allocation5 + $0x70] sm:$0xff]
    %v82 = vld [vmem:[#allocation5 + $0x78] sm:$0xff]
    %v83 = vld [vmem:[#allocation5 + $0x80] sm:$0xff]
    %v84 = vld [vmem:[#allocation5 + $0x88] sm:$0xff]
    %v85 = vld [vmem:[#allocation5 + $0x90] sm:$0xff]
    %v86 = vld [vmem:[#allocation5 + $0x98] sm:$0xff]
    %v87 = vld [vmem:[#allocation5 + $0xa0] sm:$0xff]
    %v88 = vld [vmem:[#allocation5 + $0xa8] sm:$0xff]
    %v89 = vld [vmem:[#allocation5 + $0xb0] sm:$0xff]
    %v90 = vld [vmem:[#allocation5 + $0xb8] sm:$0xff]
    %v91 = vld [vmem:[#allocation5 + $0xc0] sm:$0xff]
    %v92 = vld [vmem:[#allocation5 + $0xc8] sm:$0xff]
    %v93 = vld [vmem:[#allocation5 + $0xd0] sm:$0xff]
    %v94 = vld [vmem:[#allocation5 + $0xd8] sm:$0xff]
    %v95 = vld [vmem:[#allocation5 + $0xe0] sm:$0xff]
    %v96 = vld [vmem:[#allocation5 + $0xe8] sm:$0xff]
    %v97 = vld [vmem:[#allocation5 + $0xf0] sm:$0xff]
    %v98 = vld [vmem:[#allocation5 + $0xf8] sm:$0xff]
    %v100 = vlaneseq
    %v101 = vshrl.u32 %v100, 7
    %v102 = vsub.s32 0, %v101
    %v103 = vrot.slane %v63, %v102
    %v104 = vlaneseq
    %v105 = vshrl.u32 %v104, 7
    %v106 = vsub.s32 1, %v105
    %v107 = vrot.slane %v63, %v106
    %v108 = vlaneseq
    %v109 = vshrl.u32 %v108, 7
    %v110 = vsub.s32 2, %v109
    %v111 = vrot.slane %v63, %v110
    %v112 = vlaneseq
    %v113 = vshrl.u32 %v112, 7
    %v114 = vsub.s32 3, %v113
    %v115 = vrot.slane %v63, %v114
    %v122 = vunpack.c.l.b16 %v65
    %v123 = vunpack.c.l.b16 %v66
    %v124 = vpack.c.b16 %v123, %v122
    %v158 = vunpack.c.l.b16 %v67
    %v159 = vunpack.c.h.b16 %v67
    %v160 = vunpack.c.l.b16 %v68
    %v161 = vunpack.c.h.b16 %v68
    %v162 = vunpack.c.l.b16 %v69
    %v163 = vunpack.c.h.b16 %v69
    %v164 = vunpack.c.l.b16 %v70
    %v165 = vunpack.c.h.b16 %v70
    %v166 = vunpack.c.l.b16 %v71
    %v167 = vunpack.c.h.b16 %v71
    %v168 = vunpack.c.l.b16 %v72
    %v169 = vunpack.c.h.b16 %v72
    %v170 = vunpack.c.l.b16 %v73
    %v171 = vunpack.c.h.b16 %v73
    %v172 = vunpack.c.l.b16 %v74
    %v173 = vunpack.c.h.b16 %v74
    %v174 = vunpack.c.l.b16 %v75
    %v175 = vunpack.c.h.b16 %v75
    %v176 = vunpack.c.l.b16 %v76
    %v177 = vunpack.c.h.b16 %v76
    %v178 = vunpack.c.l.b16 %v77
    %v179 = vunpack.c.h.b16 %v77
    %v180 = vunpack.c.l.b16 %v78
    %v181 = vunpack.c.h.b16 %v78
    %v182 = vunpack.c.l.b16 %v79
    %v183 = vunpack.c.h.b16 %v79
    %v184 = vunpack.c.l.b16 %v80
    %v185 = vunpack.c.h.b16 %v80
    %v186 = vunpack.c.l.b16 %v81
    %v187 = vunpack.c.h.b16 %v81
    %v188 = vunpack.c.l.b16 %v82
    %v189 = vunpack.c.h.b16 %v82
    %v190 = vunpack.c.l.b16 %v83
    %v191 = vunpack.c.h.b16 %v83
    %v192 = vunpack.c.l.b16 %v84
    %v193 = vunpack.c.h.b16 %v84
    %v194 = vunpack.c.l.b16 %v85
    %v195 = vunpack.c.h.b16 %v85
    %v196 = vunpack.c.l.b16 %v86
    %v197 = vunpack.c.h.b16 %v86
    %v198 = vunpack.c.l.b16 %v87
    %v199 = vunpack.c.h.b16 %v87
    %v200 = vunpack.c.l.b16 %v88
    %v201 = vunpack.c.h.b16 %v88
    %v202 = vunpack.c.l.b16 %v89
    %v203 = vunpack.c.h.b16 %v89
    %v204 = vunpack.c.l.b16 %v90
    %v205 = vunpack.c.h.b16 %v90
    %v206 = vunpack.c.l.b16 %v91
    %v207 = vunpack.c.h.b16 %v91
    %v208 = vunpack.c.l.b16 %v92
    %v209 = vunpack.c.h.b16 %v92
    %v210 = vunpack.c.l.b16 %v93
    %v211 = vunpack.c.h.b16 %v93
    %v212 = vunpack.c.l.b16 %v94
    %v213 = vunpack.c.h.b16 %v94
    %v214 = vunpack.c.l.b16 %v95
    %v215 = vunpack.c.h.b16 %v95
    %v216 = vunpack.c.l.b16 %v96
    %v217 = vunpack.c.h.b16 %v96
    %v218 = vunpack.c.l.b16 %v97
    %v219 = vunpack.c.h.b16 %v97
    %v220 = vunpack.c.l.b16 %v98
    %v221 = vunpack.c.h.b16 %v98
    %v222 = vpack.c.b16 %v162, %v158
    %v223 = vpack.c.b16 %v163, %v159
    %v224 = vpack.c.b16 %v164, %v160
    %v225 = vpack.c.b16 %v165, %v161
    %v226 = vpack.c.b16 %v170, %v166
    %v227 = vpack.c.b16 %v171, %v167
    %v228 = vpack.c.b16 %v172, %v168
    %v229 = vpack.c.b16 %v173, %v169
    %v230 = vpack.c.b16 %v178, %v174
    %v231 = vpack.c.b16 %v179, %v175
    %v232 = vpack.c.b16 %v180, %v176
    %v233 = vpack.c.b16 %v181, %v177
    %v234 = vpack.c.b16 %v186, %v182
    %v235 = vpack.c.b16 %v187, %v183
    %v236 = vpack.c.b16 %v188, %v184
    %v237 = vpack.c.b16 %v189, %v185
    %v238 = vpack.c.b16 %v194, %v190
    %v239 = vpack.c.b16 %v195, %v191
    %v240 = vpack.c.b16 %v196, %v192
    %v241 = vpack.c.b16 %v197, %v193
    %v242 = vpack.c.b16 %v202, %v198
    %v243 = vpack.c.b16 %v203, %v199
    %v244 = vpack.c.b16 %v204, %v200
    %v245 = vpack.c.b16 %v205, %v201
    %v246 = vpack.c.b16 %v210, %v206
    %v247 = vpack.c.b16 %v211, %v207
    %v248 = vpack.c.b16 %v212, %v208
    %v249 = vpack.c.b16 %v213, %v209
    %v250 = vpack.c.b16 %v218, %v214
    %v251 = vpack.c.b16 %v219, %v215
    %v252 = vpack.c.b16 %v220, %v216
    %v253 = vpack.c.b16 %v221, %v217
    %286 = vmatprep.subr.bf16.mxu0 %v223
    %287 = vmatpush1.bf16.msra.mxu0 %v222
    %288 = vmatprep.subr.bf16.mxu0 %v227
    %289 = vmatpush1.bf16.msra.mxu0 %v226
    %290 = vmatprep.subr.bf16.mxu0 %v231
    %291 = vmatpush1.bf16.msra.mxu0 %v230
    %292 = vmatprep.subr.bf16.mxu0 %v235
    %293 = vmatpush1.bf16.msra.mxu0 %v234
    %294 = vmatprep.subr.bf16.mxu0 %v239
    %295 = vmatpush1.bf16.msra.mxu0 %v238
    %296 = vmatprep.subr.bf16.mxu0 %v243
    %297 = vmatpush1.bf16.msra.mxu0 %v242
    %298 = vmatprep.subr.bf16.mxu0 %v247
    %299 = vmatpush1.bf16.msra.mxu0 %v246
    %300 = vmatprep.subr.bf16.mxu0 %v251
    %301 = vmatpush1.bf16.msra.mxu0 %v250
    %302 = vmatprep.subr.bf16.mxu0 0
    %303 = vmatpush1.bf16.msra.mxu0 0
    %304 = vmatprep.subr.bf16.mxu0 0
    %305 = vmatpush1.bf16.msra.mxu0 0
    %306 = vmatprep.subr.bf16.mxu0 0
    %307 = vmatpush1.bf16.msra.mxu0 0
    %308 = vmatprep.subr.bf16.mxu0 0
    %309 = vmatpush1.bf16.msra.mxu0 0
    %310 = vmatprep.subr.bf16.mxu0 0
    %311 = vmatpush1.bf16.msra.mxu0 0
    %312 = vmatprep.subr.bf16.mxu0 0
    %313 = vmatpush1.bf16.msra.mxu0 0
    %314 = vmatprep.subr.bf16.mxu0 0
    %315 = vmatpush1.bf16.msra.mxu0 0
    %316 = vmatprep.subr.bf16.mxu0 0
    %317 = vmatpush1.bf16.msra.mxu0 0
    %318 = vmatprep.mubr.bf16.mxu0 0
    %319 = vmatmul.mubr.bf16.gmra.mrb[0].mxu0 %v124
    %v320 = vpop.f32.mrb[0].mxu0
    %v321 = vadd.f32 %v103, %v320
    %v322 = vpop.f32.mrb[0].mxu0
    %v323 = vadd.f32 %v107, %v322
    %v324 = vpop.f32.mrb[0].mxu0
    %v325 = vadd.f32 %v103, %v324
    %v326 = vpop.f32.mrb[0].mxu0
    %v327 = vadd.f32 %v107, %v326
    %328 = vdwg.mxu0
    %329 = vmatprep.subr.bf16.mxu0 %v225
    %330 = vmatpush1.bf16.msra.mxu0 %v224
    %331 = vmatprep.subr.bf16.mxu0 %v229
    %332 = vmatpush1.bf16.msra.mxu0 %v228
    %333 = vmatprep.subr.bf16.mxu0 %v233
    %334 = vmatpush1.bf16.msra.mxu0 %v232
    %335 = vmatprep.subr.bf16.mxu0 %v237
    %336 = vmatpush1.bf16.msra.mxu0 %v236
    %337 = vmatprep.subr.bf16.mxu0 %v241
    %338 = vmatpush1.bf16.msra.mxu0 %v240
    %339 = vmatprep.subr.bf16.mxu0 %v245
    %340 = vmatpush1.bf16.msra.mxu0 %v244
    %341 = vmatprep.subr.bf16.mxu0 %v249
    %342 = vmatpush1.bf16.msra.mxu0 %v248
    %343 = vmatprep.subr.bf16.mxu0 %v253
    %344 = vmatpush1.bf16.msra.mxu0 %v252
    %345 = vmatprep.subr.bf16.mxu0 0
    %346 = vmatpush1.bf16.msra.mxu0 0
    %347 = vmatprep.subr.bf16.mxu0 0
    %348 = vmatpush1.bf16.msra.mxu0 0
    %349 = vmatprep.subr.bf16.mxu0 0
    %350 = vmatpush1.bf16.msra.mxu0 0
    %351 = vmatprep.subr.bf16.mxu0 0
    %352 = vmatpush1.bf16.msra.mxu0 0
    %353 = vmatprep.subr.bf16.mxu0 0
    %354 = vmatpush1.bf16.msra.mxu0 0
    %355 = vmatprep.subr.bf16.mxu0 0
    %356 = vmatpush1.bf16.msra.mxu0 0
    %357 = vmatprep.subr.bf16.mxu0 0
    %358 = vmatpush1.bf16.msra.mxu0 0
    %359 = vmatprep.subr.bf16.mxu0 0
    %360 = vmatpush1.bf16.msra.mxu0 0
    %361 = vmatprep.mubr.bf16.mxu0 0
    %362 = vmatmul.mubr.bf16.gmra.mrb[0].mxu0 %v124
    %v363 = vpop.f32.mrb[0].mxu0
    %v364 = vadd.f32 %v111, %v363
    %v365 = vpop.f32.mrb[0].mxu0
    %v366 = vadd.f32 %v115, %v365
    %v367 = vpop.f32.mrb[0].mxu0
    %v368 = vadd.f32 %v111, %v367
    %v369 = vpop.f32.mrb[0].mxu0
    %v370 = vadd.f32 %v115, %v369
    %371 = vdwg.mxu0
    %v372 = vmul.f32 %v321, 0.5
    %v373 = vmul.f32 %v323, 0.5
    %v374 = vmul.f32 %v364, 0.5
    %v375 = vmul.f32 %v366, 0.5
    %v376 = vmul.f32 %v325, 0.5
    %v377 = vmul.f32 %v327, 0.5
    %v378 = vmul.f32 %v368, 0.5
    %v379 = vmul.f32 %v370, 0.5
    %v380 = vmul.f32 %v321, %v321
    %v381 = vmul.f32 %v323, %v323
    %v382 = vmul.f32 %v364, %v364
    %v383 = vmul.f32 %v366, %v366
    %v384 = vmul.f32 %v325, %v325
    %v385 = vmul.f32 %v327, %v327
    %v386 = vmul.f32 %v368, %v368
    %v387 = vmul.f32 %v370, %v370
    %v388 = vmul.f32 %v380, %v321
    %v389 = vmul.f32 %v381, %v323
    %v390 = vmul.f32 %v382, %v364
    %v391 = vmul.f32 %v383, %v366
    %v392 = vmul.f32 %v384, %v325
    %v393 = vmul.f32 %v385, %v327
    %v394 = vmul.f32 %v386, %v368
    %v395 = vmul.f32 %v387, %v370
    %v396 = vmul.f32 %v388, 0.044715
    %v397 = vmul.f32 %v389, 0.044715
    %v398 = vmul.f32 %v390, 0.044715
    %v399 = vmul.f32 %v391, 0.044715
    %v400 = vmul.f32 %v392, 0.044715
    %v401 = vmul.f32 %v393, 0.044715
    %v402 = vmul.f32 %v394, 0.044715
    %v403 = vmul.f32 %v395, 0.044715
    %v404 = vadd.f32 %v321, %v396
    %v405 = vadd.f32 %v323, %v397
    %v406 = vadd.f32 %v364, %v398
    %v407 = vadd.f32 %v366, %v399
    %v408 = vadd.f32 %v325, %v400
    %v409 = vadd.f32 %v327, %v401
    %v410 = vadd.f32 %v368, %v402
    %v411 = vadd.f32 %v370, %v403
    %v412 = vmul.f32 %v404, 0.7978846
    %v413 = vmul.f32 %v405, 0.7978846
    %v414 = vmul.f32 %v406, 0.7978846
    %v415 = vmul.f32 %v407, 0.7978846
    %v416 = vmul.f32 %v408, 0.7978846
    %v417 = vmul.f32 %v409, 0.7978846
    %v418 = vmul.f32 %v410, 0.7978846
    %v419 = vmul.f32 %v411, 0.7978846
    %v420 = vtanh.pop %v412
    %v421 = vtanh.pop %v413
    %v422 = vtanh.pop %v414
    %v423 = vtanh.pop %v415
    %v424 = vtanh.pop %v416
    %v425 = vtanh.pop %v417
    %v426 = vtanh.pop %v418
    %v427 = vtanh.pop %v419
    %v428 = vadd.f32 %v420, 1.0
    %v429 = vadd.f32 %v421, 1.0
    %v430 = vadd.f32 %v422, 1.0
    %v431 = vadd.f32 %v423, 1.0
    %v432 = vadd.f32 %v424, 1.0
    %v433 = vadd.f32 %v425, 1.0
    %v434 = vadd.f32 %v426, 1.0
    %v435 = vadd.f32 %v427, 1.0
    %v436 = vmul.f32 %v372, %v428
    %v437 = vmul.f32 %v373, %v429
    %v438 = vmul.f32 %v374, %v430
    %v439 = vmul.f32 %v375, %v431
    %v440 = vmul.f32 %v376, %v432
    %v441 = vmul.f32 %v377, %v433
    %v442 = vmul.f32 %v378, %v434
    %v443 = vmul.f32 %v379, %v435
    %v444 = vpack.c.bf16 %v440, %v436
    %v445 = vpack.c.bf16 %v441, %v437
    %v446 = vpack.c.bf16 %v442, %v438
    %v447 = vpack.c.bf16 %v443, %v439
    %v448 = vld [vmem:[#allocation7] sm:$0xf]
    %v449 = vld [vmem:[#allocation7 + $0x4] sm:$0xf]
    %v450 = vld [vmem:[#allocation7 + $0x8] sm:$0xf]
    %v451 = vld [vmem:[#allocation7 + $0xc] sm:$0xf]
    %v452 = vld [vmem:[#allocation7 + $0x10] sm:$0xf]
    %v453 = vld [vmem:[#allocation7 + $0x14] sm:$0xf]
    %v454 = vld [vmem:[#allocation7 + $0x18] sm:$0xf]
    %v455 = vld [vmem:[#allocation7 + $0x1c] sm:$0xf]
    %v456 = vld [vmem:[#allocation7 + $0x20] sm:$0xf]
    %v457 = vld [vmem:[#allocation7 + $0x24] sm:$0xf]
    %v458 = vld [vmem:[#allocation7 + $0x28] sm:$0xf]
    %v459 = vld [vmem:[#allocation7 + $0x2c] sm:$0xf]
    %v460 = vld [vmem:[#allocation7 + $0x30] sm:$0xf]
    %v461 = vld [vmem:[#allocation7 + $0x34] sm:$0xf]
    %v462 = vld [vmem:[#allocation7 + $0x38] sm:$0xf]
    %v463 = vld [vmem:[#allocation7 + $0x3c] sm:$0xf]
    %v464 = vld [vmem:[#allocation7 + $0x40] sm:$0xf]
    %v465 = vld [vmem:[#allocation7 + $0x44] sm:$0xf]
    %v466 = vld [vmem:[#allocation7 + $0x48] sm:$0xf]
    %v467 = vld [vmem:[#allocation7 + $0x4c] sm:$0xf]
    %v468 = vld [vmem:[#allocation7 + $0x50] sm:$0xf]
    %v469 = vld [vmem:[#allocation7 + $0x54] sm:$0xf]
    %v470 = vld [vmem:[#allocation7 + $0x58] sm:$0xf]
    %v471 = vld [vmem:[#allocation7 + $0x5c] sm:$0xf]
    %v472 = vld [vmem:[#allocation7 + $0x60] sm:$0xf]
    %v473 = vld [vmem:[#allocation7 + $0x64] sm:$0xf]
    %v474 = vld [vmem:[#allocation7 + $0x68] sm:$0xf]
    %v475 = vld [vmem:[#allocation7 + $0x6c] sm:$0xf]
    %v476 = vld [vmem:[#allocation7 + $0x70] sm:$0xf]
    %v477 = vld [vmem:[#allocation7 + $0x74] sm:$0xf]
    %v478 = vld [vmem:[#allocation7 + $0x78] sm:$0xf]
    %v479 = vld [vmem:[#allocation7 + $0x7c] sm:$0xf]
    %v480 = vld [vmem:[#allocation7 + $0x80] sm:$0xf]
    %v481 = vld [vmem:[#allocation7 + $0x84] sm:$0xf]
    %v482 = vld [vmem:[#allocation7 + $0x88] sm:$0xf]
    %v483 = vld [vmem:[#allocation7 + $0x8c] sm:$0xf]
    %v484 = vld [vmem:[#allocation7 + $0x90] sm:$0xf]
    %v485 = vld [vmem:[#allocation7 + $0x94] sm:$0xf]
    %v486 = vld [vmem:[#allocation7 + $0x98] sm:$0xf]
    %v487 = vld [vmem:[#allocation7 + $0x9c] sm:$0xf]
    %v488 = vld [vmem:[#allocation7 + $0xa0] sm:$0xf]
    %v489 = vld [vmem:[#allocation7 + $0xa4] sm:$0xf]
    %v490 = vld [vmem:[#allocation7 + $0xa8] sm:$0xf]
    %v491 = vld [vmem:[#allocation7 + $0xac] sm:$0xf]
    %v492 = vld [vmem:[#allocation7 + $0xb0] sm:$0xf]
    %v493 = vld [vmem:[#allocation7 + $0xb4] sm:$0xf]
    %v494 = vld [vmem:[#allocation7 + $0xb8] sm:$0xf]
    %v495 = vld [vmem:[#allocation7 + $0xbc] sm:$0xf]
    %v496 = vld [vmem:[#allocation7 + $0xc0] sm:$0xf]
    %v497 = vld [vmem:[#allocation7 + $0xc4] sm:$0xf]
    %v498 = vld [vmem:[#allocation7 + $0xc8] sm:$0xf]
    %v499 = vld [vmem:[#allocation7 + $0xcc] sm:$0xf]
    %v500 = vld [vmem:[#allocation7 + $0xd0] sm:$0xf]
    %v501 = vld [vmem:[#allocation7 + $0xd4] sm:$0xf]
    %v502 = vld [vmem:[#allocation7 + $0xd8] sm:$0xf]
    %v503 = vld [vmem:[#allocation7 + $0xdc] sm:$0xf]
    %v504 = vld [vmem:[#allocation7 + $0xe0] sm:$0xf]
    %v505 = vld [vmem:[#allocation7 + $0xe4] sm:$0xf]
    %v506 = vld [vmem:[#allocation7 + $0xe8] sm:$0xf]
    %v507 = vld [vmem:[#allocation7 + $0xec] sm:$0xf]
    %v508 = vld [vmem:[#allocation7 + $0xf0] sm:$0xf]
    %v509 = vld [vmem:[#allocation7 + $0xf4] sm:$0xf]
    %v510 = vld [vmem:[#allocation7 + $0xf8] sm:$0xf]
    %v511 = vld [vmem:[#allocation7 + $0xfc] sm:$0xf]
    %v513 = vlaneseq
    %v514 = vshrl.u32 %v513, 7
    %v515 = vsub.s32 0, %v514
    %v516 = vrot.slane %v64, %v515
    %v582 = vunpack.c.l.b16 %v448
    %v583 = vunpack.c.l.b16 %v449
    %v584 = vunpack.c.l.b16 %v450
    %v585 = vunpack.c.l.b16 %v451
    %v586 = vunpack.c.l.b16 %v452
    %v587 = vunpack.c.l.b16 %v453
    %v588 = vunpack.c.l.b16 %v454
    %v589 = vunpack.c.l.b16 %v455
    %v590 = vunpack.c.l.b16 %v456
    %v591 = vunpack.c.l.b16 %v457
    %v592 = vunpack.c.l.b16 %v458
    %v593 = vunpack.c.l.b16 %v459
    %v594 = vunpack.c.l.b16 %v460
    %v595 = vunpack.c.l.b16 %v461
    %v596 = vunpack.c.l.b16 %v462
    %v597 = vunpack.c.l.b16 %v463
    %v598 = vunpack.c.l.b16 %v464
    %v599 = vunpack.c.l.b16 %v465
    %v600 = vunpack.c.l.b16 %v466
    %v601 = vunpack.c.l.b16 %v467
    %v602 = vunpack.c.l.b16 %v468
    %v603 = vunpack.c.l.b16 %v469
    %v604 = vunpack.c.l.b16 %v470
    %v605 = vunpack.c.l.b16 %v471
    %v606 = vunpack.c.l.b16 %v472
    %v607 = vunpack.c.l.b16 %v473
    %v608 = vunpack.c.l.b16 %v474
    %v609 = vunpack.c.l.b16 %v475
    %v610 = vunpack.c.l.b16 %v476
    %v611 = vunpack.c.l.b16 %v477
    %v612 = vunpack.c.l.b16 %v478
    %v613 = vunpack.c.l.b16 %v479
    %v614 = vunpack.c.l.b16 %v480
    %v615 = vunpack.c.l.b16 %v481
    %v616 = vunpack.c.l.b16 %v482
    %v617 = vunpack.c.l.b16 %v483
    %v618 = vunpack.c.l.b16 %v484
    %v619 = vunpack.c.l.b16 %v485
    %v620 = vunpack.c.l.b16 %v486
    %v621 = vunpack.c.l.b16 %v487
    %v622 = vunpack.c.l.b16 %v488
    %v623 = vunpack.c.l.b16 %v489
    %v624 = vunpack.c.l.b16 %v490
    %v625 = vunpack.c.l.b16 %v491
    %v626 = vunpack.c.l.b16 %v492
    %v627 = vunpack.c.l.b16 %v493
    %v628 = vunpack.c.l.b16 %v494
    %v629 = vunpack.c.l.b16 %v495
    %v630 = vunpack.c.l.b16 %v496
    %v631 = vunpack.c.l.b16 %v497
    %v632 = vunpack.c.l.b16 %v498
    %v633 = vunpack.c.l.b16 %v499
    %v634 = vunpack.c.l.b16 %v500
    %v635 = vunpack.c.l.b16 %v501
    %v636 = vunpack.c.l.b16 %v502
    %v637 = vunpack.c.l.b16 %v503
    %v638 = vunpack.c.l.b16 %v504
    %v639 = vunpack.c.l.b16 %v505
    %v640 = vunpack.c.l.b16 %v506
    %v641 = vunpack.c.l.b16 %v507
    %v642 = vunpack.c.l.b16 %v508
    %v643 = vunpack.c.l.b16 %v509
    %v644 = vunpack.c.l.b16 %v510
    %v645 = vunpack.c.l.b16 %v511
    %v646 = vpack.c.b16 %v583, %v582
    %v647 = vpack.c.b16 %v585, %v584
    %v648 = vpack.c.b16 %v587, %v586
    %v649 = vpack.c.b16 %v589, %v588
    %v650 = vpack.c.b16 %v591, %v590
    %v651 = vpack.c.b16 %v593, %v592
    %v652 = vpack.c.b16 %v595, %v594
    %v653 = vpack.c.b16 %v597, %v596
    %v654 = vpack.c.b16 %v599, %v598
    %v655 = vpack.c.b16 %v601, %v600
    %v656 = vpack.c.b16 %v603, %v602
    %v657 = vpack.c.b16 %v605, %v604
    %v658 = vpack.c.b16 %v607, %v606
    %v659 = vpack.c.b16 %v609, %v608
    %v660 = vpack.c.b16 %v611, %v610
    %v661 = vpack.c.b16 %v613, %v612
    %v662 = vpack.c.b16 %v615, %v614
    %v663 = vpack.c.b16 %v617, %v616
    %v664 = vpack.c.b16 %v619, %v618
    %v665 = vpack.c.b16 %v621, %v620
    %v666 = vpack.c.b16 %v623, %v622
    %v667 = vpack.c.b16 %v625, %v624
    %v668 = vpack.c.b16 %v627, %v626
    %v669 = vpack.c.b16 %v629, %v628
    %v670 = vpack.c.b16 %v631, %v630
    %v671 = vpack.c.b16 %v633, %v632
    %v672 = vpack.c.b16 %v635, %v634
    %v673 = vpack.c.b16 %v637, %v636
    %v674 = vpack.c.b16 %v639, %v638
    %v675 = vpack.c.b16 %v641, %v640
    %v676 = vpack.c.b16 %v643, %v642
    %v677 = vpack.c.b16 %v645, %v644
    %710 = vmatprep.subr.bf16.mxu0 0
    %711 = vmatpush1.bf16.msra.mxu0 %v646
    %712 = vmatprep.subr.bf16.mxu0 0
    %713 = vmatpush1.bf16.msra.mxu0 %v647
    %714 = vmatprep.subr.bf16.mxu0 0
    %715 = vmatpush1.bf16.msra.mxu0 %v648
    %716 = vmatprep.subr.bf16.mxu0 0
    %717 = vmatpush1.bf16.msra.mxu0 %v649
    %718 = vmatprep.subr.bf16.mxu0 0
    %719 = vmatpush1.bf16.msra.mxu0 %v650
    %720 = vmatprep.subr.bf16.mxu0 0
    %721 = vmatpush1.bf16.msra.mxu0 %v651
    %722 = vmatprep.subr.bf16.mxu0 0
    %723 = vmatpush1.bf16.msra.mxu0 %v652
    %724 = vmatprep.subr.bf16.mxu0 0
    %725 = vmatpush1.bf16.msra.mxu0 %v653
    %726 = vmatprep.subr.bf16.mxu0 0
    %727 = vmatpush1.bf16.msra.mxu0 %v654
    %728 = vmatprep.subr.bf16.mxu0 0
    %729 = vmatpush1.bf16.msra.mxu0 %v655
    %730 = vmatprep.subr.bf16.mxu0 0
    %731 = vmatpush1.bf16.msra.mxu0 %v656
    %732 = vmatprep.subr.bf16.mxu0 0
    %733 = vmatpush1.bf16.msra.mxu0 %v657
    %734 = vmatprep.subr.bf16.mxu0 0
    %735 = vmatpush1.bf16.msra.mxu0 %v658
    %736 = vmatprep.subr.bf16.mxu0 0
    %737 = vmatpush1.bf16.msra.mxu0 %v659
    %738 = vmatprep.subr.bf16.mxu0 0
    %739 = vmatpush1.bf16.msra.mxu0 %v660
    %740 = vmatprep.subr.bf16.mxu0 0
    %741 = vmatpush1.bf16.msra.mxu0 %v661
    %742 = vmatprep.mubr.bf16.mxu0 %v445
    %743 = vmatmul.mubr.bf16.gmra.mrb[0].mxu0 %v444
    %v744 = vpop.f32.mrb[0].mxu0
    %v745 = vadd.f32 %v516, %v744
    %v746 = vpop.f32.mrb[0].mxu0
    %v747 = vpop.f32.mrb[0].mxu0
    %v748 = vadd.f32 %v516, %v747
    %v749 = vpop.f32.mrb[0].mxu0
    %750 = vdwg.mxu0
    %751 = vmatprep.subr.bf16.mxu0 0
    %752 = vmatpush1.bf16.msra.mxu0 %v662
    %753 = vmatprep.subr.bf16.mxu0 0
    %754 = vmatpush1.bf16.msra.mxu0 %v663
    %755 = vmatprep.subr.bf16.mxu0 0
    %756 = vmatpush1.bf16.msra.mxu0 %v664
    %757 = vmatprep.subr.bf16.mxu0 0
    %758 = vmatpush1.bf16.msra.mxu0 %v665
    %759 = vmatprep.subr.bf16.mxu0 0
    %760 = vmatpush1.bf16.msra.mxu0 %v666
    %761 = vmatprep.subr.bf16.mxu0 0
    %762 = vmatpush1.bf16.msra.mxu0 %v667
    %763 = vmatprep.subr.bf16.mxu0 0
    %764 = vmatpush1.bf16.msra.mxu0 %v668
    %765 = vmatprep.subr.bf16.mxu0 0
    %766 = vmatpush1.bf16.msra.mxu0 %v669
    %767 = vmatprep.subr.bf16.mxu0 0
    %768 = vmatpush1.bf16.msra.mxu0 %v670
    %769 = vmatprep.subr.bf16.mxu0 0
    %770 = vmatpush1.bf16.msra.mxu0 %v671
    %771 = vmatprep.subr.bf16.mxu0 0
    %772 = vmatpush1.bf16.msra.mxu0 %v672
    %773 = vmatprep.subr.bf16.mxu0 0
    %774 = vmatpush1.bf16.msra.mxu0 %v673
    %775 = vmatprep.subr.bf16.mxu0 0
    %776 = vmatpush1.bf16.msra.mxu0 %v674
    %777 = vmatprep.subr.bf16.mxu0 0
    %778 = vmatpush1.bf16.msra.mxu0 %v675
    %779 = vmatprep.subr.bf16.mxu0 0
    %780 = vmatpush1.bf16.msra.mxu0 %v676
    %781 = vmatprep.subr.bf16.mxu0 0
    %782 = vmatpush1.bf16.msra.mxu0 %v677
    %783 = vmatprep.mubr.bf16.mxu0 %v447
    %784 = vmatmul.mubr.bf16.gmra.mrb[0].mxu0 %v446
    %v785 = vpop.f32.mrb[0].mxu0
    %v786 = vadd.f32 %v745, %v785
    %v787 = vpop.f32.mrb[0].mxu0
    %v788 = vpop.f32.mrb[0].mxu0
    %v789 = vadd.f32 %v748, %v788
    %v790 = vpop.f32.mrb[0].mxu0
    %791 = vdwg.mxu0
    %792 = vst [vmem:[#allocation8] sm:$0xff] %v786
    %793 = vst [vmem:[#allocation8 + $0x8] sm:$0xff] %v789
    // Predicated region
    $region34: #{tpu_custom_call.1} parent=1 // pred_check
      _
    $region35: #{tpu_custom_call.1} parent=1 // pred_check_branch
      %795 = sbr.rel (0) target = $region37
    $region36: #{tpu_custom_call.1} parent=1 // pred_region
      %s797 = ssub.s32 256, 256
      %798 = vsyncadd [#allocation4], %s797
      %s799 = sshll.u32 [#allocation8], 4
      %s800 = int_to_ptr.vmem [resolvable:$true] %s799
      %805 = dma.vmem_to_hbm [thread:$0]  %s800, 256, %s5, [#allocation4], 128, 128, 8
    $region37: #{tpu_custom_call.1} parent=1 // pred_fallthru
      _
    // Predicated region
    $region38: #{tpu_custom_call.1} parent=1 // pred_check
      _
    $region39: #{tpu_custom_call.1} parent=1 // pred_check_branch
      %807 = sbr.rel (0) target = $region41
    $region40: #{tpu_custom_call.1} parent=1 // pred_region
      %808 = dma.done [#allocation4], 256
    $region41: #{tpu_custom_call.1} parent=1 // pred_fallthru
      _
    %809 = vsyncpa [#allocation3], 1
    %810 = vsyncpa [#allocation6], 1
    %811 = vsyncpa [#allocation4], 1

</llo_original>
